<compile_context>
chip_gen: v6e
topology: v6e:2x2x1
jax: 0.10.0
libtpu: 0.0.40
codegen_flags: <defaults>
</compile_context>

<pallas_src>
import functools

import jax
import jax.numpy as jnp
from jax.experimental import pallas as pl
from jax.experimental.pallas import tpu as pltpu


def _round_up(v, m):
    return (v + m - 1) // m * m


def _vmem_capacity_bytes():
    """Physical VMEM capacity (fallback: 64 MiB, conservative for all gens)."""
    try:
        info = pltpu.get_tpu_info()
        cap = getattr(info, "vmem_capacity_bytes", None)
        if cap:
            return int(cap)
    except Exception:
        pass
    return 64 * 1024 * 1024


def _prefers_f32_fold():
    """True on chips without a bf16 VPU path (v5e and older)."""
    try:
        kind = jax.devices()[0].device_kind.lower()
        return any(s in kind for s in ("v5 lite", "v5e", "v4", "v3", "v2"))
    except Exception:
        return False


def _nll_pick_kernel(x_ref, t_ref, out_ref, *, fold_dtype):
    """Accumulate per-row x[i, target_i] into a lane-dense (tile_n,128) partial."""
    j = pl.program_id(1)                        # class-tile index (reduction axis)
    tile_n, tile_c = x_ref.shape

    @pl.when(j == 0)
    def _():
        out_ref[...] = jnp.zeros_like(out_ref)

    # Target class index local to this class tile.  Ignored (-100) or garbage
    # targets never land in [0, tile_c), so they simply select nothing; garbage
    # lanes past C in the ragged last tile are never selected because real
    # targets are < C.
    t_local = t_ref[...] - j * tile_c           # (tile_n, 1) int32
    lane = jax.lax.broadcasted_iota(jnp.int32, (tile_n, 128), 1)
    zero = jnp.zeros((), fold_dtype)

    # Fold the tile_c/128 lane groups into a single 128-wide partial.  At most
    # one lane per row is ever non-zero, so folding in a narrow dtype is exact.
    xg = x_ref[:, 0:128].astype(fold_dtype)
    folded = jnp.where(lane == t_local, xg, zero)
    for g in range(1, tile_c // 128):
        xg = x_ref[:, g * 128:(g + 1) * 128].astype(fold_dtype)
        folded = folded + jnp.where(lane == (t_local - g * 128), xg, zero)

    out_ref[...] += folded.astype(jnp.float32)


def nll_loss(x, target, weight=None, size_average=True, ignore_index=-100,
             tile_n=None, tile_c=None):
    """Pallas implementation of torch.nn.functional.nll_loss for 2-D input (N, C)."""
    N, C = x.shape
    itemsize = jnp.dtype(x.dtype).itemsize
    t2 = target.astype(jnp.int32).reshape(N, 1)

    # ---- class tile: always a multiple of 128.  Full (rounded-up) C when
    # modest; otherwise 2048-lane slabs (>= 512 lanes => >= 1 KiB DMA runs).
    if tile_c is None:
        tile_c = _round_up(C, 128) if C <= 2048 else 2048
    else:
        tile_c = max(128, _round_up(int(tile_c), 128))
    grid_c = pl.cdiv(C, tile_c)

    # ---- generation-aware VMEM sizing (v7x: 64 MiB physical; v5e/v6e: 128 MiB)
    cap = _vmem_capacity_bytes()
    budget = min(cap // 3, 40 * 1024 * 1024)          # per-step tile budget
    vmem_limit = min(3 * cap // 4, 64 * 1024 * 1024)  # scoped-VMEM override

    # ---- row tile: fill the budget with the double-buffered x block plus the
    # lane-padded target / output-partial blocks (~2 KiB/row combined).
    if tile_n is None:
        bytes_per_row = 2 * tile_c * itemsize + 4 * 512
        tile_n = max(8, (budget // bytes_per_row) // 8 * 8)
        tile_n = min(tile_n, 4096, _round_up(N, 8))
    tile_n = int(tile_n)
    assert tile_n % 8 == 0, "tile_n must be a multiple of 8"
    grid_n = pl.cdiv(N, tile_n)

    fold_dtype = jnp.float32 if _prefers_f32_fold() else x.dtype
    kernel = functools.partial(_nll_pick_kernel, fold_dtype=fold_dtype)

    cost = pl.CostEstimate(
        flops=3 * N * C,
        transcendentals=0,
        bytes_accessed=int(N * C * itemsize + N * 4 + grid_n * tile_n * 128 * 4),
    )

    partial = pl.pallas_call(
        kernel,
        out_shape=jax.ShapeDtypeStruct((grid_n * tile_n, 128), jnp.float32),
        grid_spec=pltpu.PrefetchScalarGridSpec(
            num_scalar_prefetch=0,
            grid=(grid_n, grid_c),
            in_specs=[
                pl.BlockSpec((tile_n, tile_c), lambda i, j: (i, j)),  # log-probs
                pl.BlockSpec((tile_n, 1), lambda i, j: (i, 0)),       # targets
            ],
            out_specs=pl.BlockSpec((tile_n, 128), lambda i, j: (i, 0)),
        ),
        compiler_params=pltpu.CompilerParams(
            dimension_semantics=("parallel", "arbitrary"),
            vmem_limit_bytes=int(vmem_limit),
        ),
        cost_estimate=cost,
    )(x, t2)

    # ---- tiny O(N)+O(C) epilogue in plain JAX: weights, ignore_index, mean.
    picked = jnp.sum(partial, axis=-1)[:N]              # x[i, t_i]  (0 if never selected)
    valid = (target != ignore_index).astype(jnp.float32)
    safe_t = jnp.where(target != ignore_index, target, 0).astype(jnp.int32)
    if weight is None:
        w_t = valid
    else:
        w_t = weight.astype(jnp.float32)[safe_t] * valid
    num = -jnp.sum(w_t * picked)
    if not size_average:
        return num
    den = jnp.sum(w_t)
    return num / den                                     # NaN if all targets ignored (torch)


def _reference_nll(x, target, weight, size_average, ignore_index):
    """Pure-JAX reference mirroring torch.nn.functional.nll_loss."""
    x = x.astype(jnp.float32)
    w = weight.astype(jnp.float32)
    valid = target != ignore_index
    safe_t = jnp.where(valid, target, 0)
    w_t = w[safe_t] * valid.astype(jnp.float32)
    picked = x[jnp.arange(x.shape[0]), safe_t]
    num = -jnp.sum(w_t * picked)
    den = jnp.sum(w_t)
    return num / den if size_average else num


if __name__ == "__main__":
    key = jax.random.PRNGKey(0)
    k1, k2, k3, k4, k5, k6 = jax.random.split(key, 6)

    # Case 1: small f32 demo consistent with the module: (N, C) log-probs,
    # class weights, ignore_index exercised, mean reduction.
    N, C = 16, 32
    log_probs = jax.nn.log_softmax(jax.random.normal(k1, (N, C), jnp.float32), axis=-1)
    target = jax.random.randint(k2, (N,), 0, C, dtype=jnp.int32).at[0].set(-100)
    class_weight = jnp.linspace(0.5, 1.5, C, dtype=jnp.float32)
    loss = jax.block_until_ready(
        nll_loss(log_probs, target, class_weight, True, -100))
    ref = _reference_nll(log_probs, target, class_weight, True, -100)
    assert jnp.allclose(loss, ref, rtol=1e-4, atol=1e-4), (loss, ref)

    # Case 2: ragged N, tiled + ragged C, bf16 streamed in its own dtype,
    # sum reduction.  Exercises the multi-tile grid and masking.
    N2, C2 = 37, 300
    lp2 = jax.nn.log_softmax(
        jax.random.normal(k3, (N2, C2), jnp.float32), axis=-1).astype(jnp.bfloat16)
    t2 = jax.random.randint(k4, (N2,), 0, C2, dtype=jnp.int32).at[3].set(-100)
    w2 = jnp.linspace(0.25, 2.0, C2, dtype=jnp.float32)
    loss2 = jax.block_until_ready(
        nll_loss(lp2, t2, w2, False, -100, tile_n=16, tile_c=128))
    ref2 = _reference_nll(lp2, t2, w2, False, -100)
    assert jnp.allclose(loss2, ref2, rtol=2e-4, atol=1e-3), (loss2, ref2)

    # Case 3: default weight (None), C exactly one lane group, mean reduction.
    N3, C3 = 8, 128
    lp3 = jax.nn.log_softmax(jax.random.normal(k5, (N3, C3), jnp.float32), axis=-1)
    t3 = jax.random.randint(k6, (N3,), 0, C3, dtype=jnp.int32)
    loss3 = jax.block_until_ready(nll_loss(lp3, t3))
    ref3 = _reference_nll(lp3, t3, jnp.ones((C3,), jnp.float32), True, -100)
    assert jnp.allclose(loss3, ref3, rtol=1e-4, atol=1e-4), (loss3, ref3)

    print("KERNEL_OK")
</pallas_src>

<mosaic_0001>
module attributes {stable_mosaic.version = 11 : i64} {
  func.func @_nll_pick_kernel(%arg0: i32, %arg1: i32, %arg2: memref<16x128xf32, #tpu.memory_space<vmem>>, %arg3: memref<16x1xi32, #tpu.memory_space<vmem>>, %arg4: memref<16x128xf32, #tpu.memory_space<vmem>>) attributes {dimension_semantics = [#tpu.dimension_semantics<parallel>, #tpu.dimension_semantics<arbitrary>], iteration_bounds = array<i64: 1, 1>, scalar_prefetch = 0 : i64, scratch_operands = 0 : i64, tpu.core_type = #tpu.core_type<tc>, window_params = [{transform_indices = @transform_0, window_bounds = array<i64: 16, 128>}, {transform_indices = @transform_1, window_bounds = array<i64: 16, 1>}, {transform_indices = @transform_2, window_bounds = array<i64: 16, 128>}]} {
    %c0_i32 = arith.constant 0 : i32
    %0 = arith.cmpi eq, %arg1, %c0_i32 : i32
    %1 = arith.extui %0 : i1 to i32
    %c0_i32_0 = arith.constant 0 : i32
    %2 = arith.cmpi ne, %1, %c0_i32_0 : i32
    scf.if %2 {
      %cst_8 = arith.constant 0.000000e+00 : f32
      %16 = vector.broadcast %cst_8 : f32 to vector<16x128xf32>
      %c0_9 = arith.constant 0 : index
      %c0_10 = arith.constant 0 : index
      %17 = vector.load %arg4[%c0_9, %c0_10] : memref<16x128xf32, #tpu.memory_space<vmem>>, vector<16x128xf32>
      tpu.vector_store %arg4[%c0_9, %c0_10], %16 {strides = array<i32>} : memref<16x128xf32, #tpu.memory_space<vmem>>, vector<16x128xf32>,
    } else {
    }
    %c0 = arith.constant 0 : index
    %c0_1 = arith.constant 0 : index
    %3 = vector.load %arg3[%c0, %c0_1] : memref<16x1xi32, #tpu.memory_space<vmem>>, vector<16x1xi32>
    %c128_i32 = arith.constant 128 : i32
    %4 = arith.muli %arg1, %c128_i32 : i32
    %5 = vector.broadcast %4 : i32 to vector<16x1xi32>
    %6 = arith.subi %3, %5 : vector<16x1xi32>
    %7 = tpu.iota {dimensions = array<i32: 1>} : vector<16x128xi32>
    %c0_2 = arith.constant 0 : index
    %c0_3 = arith.constant 0 : index
    %8 = vector.load %arg2[%c0_2, %c0_3] : memref<16x128xf32, #tpu.memory_space<vmem>>, vector<16x128xf32>
    %9 = vector.broadcast %6 : vector<16x1xi32> to vector<16x128xi32>
    %10 = arith.cmpi eq, %7, %9 : vector<16x128xi32>
    %cst = arith.constant 0.000000e+00 : f32
    %11 = vector.broadcast %cst : f32 to vector<16x128xf32>
    %12 = arith.select %10, %8, %11 : vector<16x128xi1>, vector<16x128xf32>
    %c0_4 = arith.constant 0 : index
    %c0_5 = arith.constant 0 : index
    %13 = vector.load %arg4[%c0_4, %c0_5] : memref<16x128xf32, #tpu.memory_space<vmem>>, vector<16x128xf32>
    %14 = arith.addf %13, %12 : vector<16x128xf32>
    %c0_6 = arith.constant 0 : index
    %c0_7 = arith.constant 0 : index
    %15 = vector.load %arg4[%c0_6, %c0_7] : memref<16x128xf32, #tpu.memory_space<vmem>>, vector<16x128xf32>
    tpu.vector_store %arg4[%c0_6, %c0_7], %14 {strides = array<i32>} : memref<16x128xf32, #tpu.memory_space<vmem>>, vector<16x128xf32>,
    return
  }
  func.func @transform_0(%arg0: i32, %arg1: i32) -> (i32, i32) {
    %c0_i32 = arith.constant 0 : i32
    return %arg0, %arg1 : i32, i32
  }
  func.func @transform_1(%arg0: i32, %arg1: i32) -> (i32, i32) {
    %c0_i32 = arith.constant 0 : i32
    %c0_i32_0 = arith.constant 0 : i32
    return %arg0, %c0_i32 : i32, i32
  }
  func.func @transform_2(%arg0: i32, %arg1: i32) -> (i32, i32) {
    %c0_i32 = arith.constant 0 : i32
    %c0_i32_0 = arith.constant 0 : i32
    return %arg0, %c0_i32 : i32, i32
  }
}

</mosaic_0001>

<llo_original>
// kernel: tpu_custom_call.1
$region0: #{tpu_custom_call.1}
  #allocation0 [shape = 'u32[]', space=smem, size = 0x4, offset = 0x4, fixed_abs, tag = 'smem constant byte address 0x4 - core index']
  #allocation1 [shape = 'u32[144,128]{1,0:T(1,128)}', space=vmem, size = 0x12000, scoped, tag = 'internal scratch']
  %s0 = inlined_call_operand.vmem [shape: f32[16,32], index: 0, kind: input, shape index: {}]
  %s1 = inlined_call_operand.vmem [shape: s32[16,1], index: 1, kind: input, shape index: {}]
  %s2 = inlined_call_operand.hbm [shape: f32[16,128], index: 2, kind: output, shape index: {}]
  %s3 = sld [smem:[#allocation0]]
  $region22: #{tpu_custom_call.1} parent=0
    _
  %s5 = ssub.s32 1, %s3
  %s6 = scalar_select 0, %s5, %s3
  $region1: #{tpu_custom_call.1} parent=0
    #allocation2 [shape = 'u8[8192]{0}', space=vmem, size = 0x2000, scoped, tag = 'output window, operand 0, single buffered']
    #allocation3 [shape = 's32[1]{0}', space=sflag, size = 0x4, scoped, tag = 'scoped memory for tpu_custom_call.1']
    %7 = vsyncpa [#allocation3], 0
    // Predicated region
    $region2: #{tpu_custom_call.1} parent=1 // pred_check
      _
    $region3: #{tpu_custom_call.1} parent=1 // pred_check_branch
      %9 = sbr.rel (0) target = $region5
    $region4: #{tpu_custom_call.1} parent=1 // pred_region
      _
    $region5: #{tpu_custom_call.1} parent=1 // pred_fallthru
      _
    // Predicated region
    $region6: #{tpu_custom_call.1} parent=1 // pred_check
      _
    $region7: #{tpu_custom_call.1} parent=1 // pred_check_branch
      %11 = sbr.rel (0) target = $region9
    $region8: #{tpu_custom_call.1} parent=1 // pred_region
      _
    $region9: #{tpu_custom_call.1} parent=1 // pred_fallthru
      _
    %p12 = scmp.eq.s32.totalorder 0, 0
    // Predicated region
    $region10: #{tpu_custom_call.1} parent=1 // pred_check
      %p13 = pneg %p12
    $region11: #{tpu_custom_call.1} parent=1 // pred_check_branch
      %15 = sbr.rel (%p13) target = $region13
    $region12: #{tpu_custom_call.1} parent=1 // pred_region
      %16 = vst [vmem:[#allocation2] sm:$0xff] 0.0
      %17 = vst [vmem:[#allocation2 + $0x8] sm:$0xff] 0.0
    $region13: #{tpu_custom_call.1} parent=1 // pred_fallthru
      _
    %v18 = vld [vmem:[%s1] sm:$0xff]
    %v19 = vld [vmem:[%s1 + $0x8] sm:$0xff]
    %s20 = smul.u32 0, 128
    %v21 = vstv %s20
    %v22 = vsub.s32 %v18, %v21
    %v23 = vsub.s32 %v19, %v21
    %v24 = vlaneseq
    %v25 = vand.u32 %v24, 127
    %v26 = vld [vmem:[%s0] sm:$0xff]
    %v27 = vld [vmem:[%s0 + $0x8] sm:$0xff]
    %28 = vset.pattern.permute.xlu0 0
    %29 = vperm.xlu0 %28, %v22
    %v30 = vpop.permute.xlu0 %29
    %31 = vset.pattern.permute.xlu0 0
    %32 = vperm.xlu0 %31, %v23
    %v33 = vpop.permute.xlu0 %32
    %vm34 = vcmp.eq.s32.totalorder %v25, %v30
    %vm35 = vcmp.eq.s32.totalorder %v25, %v33
    %v36 = vsel %vm34, %v26, 0.0
    %v37 = vsel %vm35, %v27, 0.0
    %v38 = vld [vmem:[#allocation2] sm:$0xff]
    %v39 = vld [vmem:[#allocation2 + $0x8] sm:$0xff]
    %v40 = vadd.f32 %v38, %v36
    %v41 = vadd.f32 %v39, %v37
    %42 = vst [vmem:[#allocation2] sm:$0xff] %v40
    %43 = vst [vmem:[#allocation2 + $0x8] sm:$0xff] %v41
    // Predicated region
    $region14: #{tpu_custom_call.1} parent=1 // pred_check
      _
    $region15: #{tpu_custom_call.1} parent=1 // pred_check_branch
      %45 = sbr.rel (0) target = $region17
    $region16: #{tpu_custom_call.1} parent=1 // pred_region
      %s47 = ssub.s32 256, 256
      %48 = vsyncadd [#allocation3], %s47
      %s49 = sshll.u32 [#allocation2], 4
      %s50 = int_to_ptr.vmem [resolvable:$true] %s49
      %55 = dma.vmem_to_hbm [thread:$0]  %s50, 256, %s2, [#allocation3], 128, 128, 8
    $region17: #{tpu_custom_call.1} parent=1 // pred_fallthru
      _
    // Predicated region
    $region18: #{tpu_custom_call.1} parent=1 // pred_check
      _
    $region19: #{tpu_custom_call.1} parent=1 // pred_check_branch
      %57 = sbr.rel (0) target = $region21
    $region20: #{tpu_custom_call.1} parent=1 // pred_region
      %58 = dma.done [#allocation3], 256
    $region21: #{tpu_custom_call.1} parent=1 // pred_fallthru
      _
    %59 = vsyncpa [#allocation3], 1

</llo_original>
